<compile_context>
chip_gen: v6e
topology: v6e:2x2x1
jax: 0.10.0
libtpu: 0.0.40
codegen_flags: <defaults>
</compile_context>

<pallas_src>
import functools

import jax
import jax.numpy as jnp
from jax.experimental import pallas as pl
from jax.experimental.pallas import tpu as pltpu

_HIDDEN = 50   # nn.Linear(n_input, 50) in the reference module
_LANE = 128    # TPU lane width / MXU tile


def _round_up(x, m):
    return (x + m - 1) // m * m


def _cdiv(a, b):
    return (a + b - 1) // b


def _pad2(a, rows, cols):
    """Zero-pad a 2-D array up to (rows, cols)."""
    return jnp.pad(a, ((0, rows - a.shape[0]), (0, cols - a.shape[1])))


def _mlp_kernel(x_ref, w1_ref, w23_ref, b123_ref, w4_ref, b4_ref, o_ref, *,
                dot_dtype):
    """relu(fc1) -> relu(fc2) -> relu(fc3) -> fc4 on one (TM, n_in) batch tile."""
    x = x_ref[...].astype(dot_dtype)

    h = jnp.dot(x, w1_ref[...], preferred_element_type=jnp.float32)
    h = jnp.maximum(h + b123_ref[0:1, :], 0.0)

    h = jnp.dot(h.astype(dot_dtype), w23_ref[0],
                preferred_element_type=jnp.float32)
    h = jnp.maximum(h + b123_ref[1:2, :], 0.0)

    h = jnp.dot(h.astype(dot_dtype), w23_ref[1],
                preferred_element_type=jnp.float32)
    h = jnp.maximum(h + b123_ref[2:3, :], 0.0)

    out = jnp.dot(h.astype(dot_dtype), w4_ref[...],
                  preferred_element_type=jnp.float32) + b4_ref[...]
    o_ref[...] = out.astype(o_ref.dtype)


def prepare_params(params, dot_dtype=jnp.float32):
    """Pad/pack weights & biases once (outside the per-call jit).

    Hidden dim is zero-padded 50 -> 128 (lane-dense); input/output feature
    dims stay unpadded.  Weights are cast to `dot_dtype` (matmul operands);
    biases stay f32 (added to the f32 accumulation).
    """
    n_in = params["w1"].shape[0]
    n_out = params["w4"].shape[1]
    h_p = _round_up(_HIDDEN, _LANE)

    w1 = _pad2(params["w1"], n_in, h_p).astype(dot_dtype)          # (n_in, 128)
    w2 = _pad2(params["w2"], h_p, h_p).astype(dot_dtype)           # (128, 128)
    w3 = _pad2(params["w3"], h_p, h_p).astype(dot_dtype)           # (128, 128)
    w4 = _pad2(params["w4"], h_p, n_out).astype(dot_dtype)         # (128, n_out)
    b123 = jnp.concatenate(
        [_pad2(params[f"b{i}"], 1, h_p) for i in (1, 2, 3)], axis=0)  # (3, 128)
    b4 = params["b4"].astype(jnp.float32)                           # (1, n_out)

    return {"w1": w1, "w23": jnp.stack([w2, w3], axis=0),
            "b123": b123, "w4": w4, "b4": b4}


@functools.partial(jax.jit, static_argnames=("tm",))
def mlp_forward(x, prep, *, tm=2048):
    """Run the fused MLP Pallas kernel.

    x:    (B, n_input) float32
    prep: output of prepare_params().
    """
    B, n_in = x.shape
    h_p = prep["w1"].shape[1]
    n_out = prep["w4"].shape[1]
    dot_dtype = prep["w1"].dtype

    # Balanced batch tiling: >= 2 grid steps once B >= 16 (both v7x cores
    # busy under "parallel"), tiles capped at `tm` rows, rows padded to a
    # multiple of 8 sublanes only as needed.
    b8 = _round_up(B, 8)
    n_tiles = max(2, _cdiv(b8, tm)) if b8 >= 16 else 1
    tm_eff = _round_up(_cdiv(b8, n_tiles), 8)
    bp = tm_eff * n_tiles

    xp = x if bp == B else jnp.pad(x, ((0, bp - B), (0, 0)))

    def resident2(i):
        return (0, 0)

    in_specs = [
        pl.BlockSpec((tm_eff, n_in), lambda i: (i, 0)),     # x tile (pipelined)
        pl.BlockSpec((n_in, h_p), resident2),               # w1   (VMEM-resident)
        pl.BlockSpec((2, h_p, h_p), lambda i: (0, 0, 0)),   # w2,w3 stacked
        pl.BlockSpec((3, h_p), resident2),                  # b1,b2,b3 stacked
        pl.BlockSpec((h_p, n_out), resident2),              # w4
        pl.BlockSpec((1, n_out), resident2),                # b4
    ]
    out_spec = pl.BlockSpec((tm_eff, n_out), lambda i: (i, 0))

    # Advisory cost estimate on real (unpadded) dims.
    dot_bytes = jnp.dtype(dot_dtype).itemsize
    flops = 2 * B * (n_in * _HIDDEN + 2 * _HIDDEN * _HIDDEN + _HIDDEN * n_out)
    bytes_accessed = (4 * B * (n_in + n_out)
                      + dot_bytes * (n_in * h_p + 2 * h_p * h_p + h_p * n_out)
                      + 4 * (3 * h_p + n_out))

    out = pl.pallas_call(
        functools.partial(_mlp_kernel, dot_dtype=dot_dtype),
        out_shape=jax.ShapeDtypeStruct((bp, n_out), jnp.float32),
        grid=(n_tiles,),
        in_specs=in_specs,
        out_specs=out_spec,
        compiler_params=pltpu.CompilerParams(
            dimension_semantics=("parallel",)),   # megacore-shardable on v7x
        cost_estimate=pl.CostEstimate(
            flops=flops, transcendentals=0, bytes_accessed=bytes_accessed),
    )(xp, prep["w1"], prep["w23"], prep["b123"], prep["w4"], prep["b4"])

    return out if bp == B else out[:B]


def init_params(key, n_input, n_output, hidden=_HIDDEN):
    """Deterministic PyTorch-style (uniform +/- 1/sqrt(fan_in)) init."""
    dims = [(n_input, hidden), (hidden, hidden), (hidden, hidden),
            (hidden, n_output)]
    params = {}
    for i, (fan_in, fan_out) in enumerate(dims, start=1):
        key, kw, kb = jax.random.split(key, 3)
        bound = 1.0 / jnp.sqrt(float(fan_in))
        params[f"w{i}"] = jax.random.uniform(
            kw, (fan_in, fan_out), jnp.float32, -bound, bound)
        params[f"b{i}"] = jax.random.uniform(
            kb, (1, fan_out), jnp.float32, -bound, bound)
    return params


def reference_forward(x, params):
    """Pure-JAX reference for correctness checking."""
    h = jnp.maximum(x @ params["w1"] + params["b1"], 0.0)
    h = jnp.maximum(h @ params["w2"] + params["b2"], 0.0)
    h = jnp.maximum(h @ params["w3"] + params["b3"], 0.0)
    return h @ params["w4"] + params["b4"]


if __name__ == "__main__":
    key = jax.random.PRNGKey(0)
    batch, n_input, n_output = 8, 16, 4

    key, kx, kp = jax.random.split(key, 3)
    x = jax.random.normal(kx, (batch, n_input), jnp.float32)
    params = init_params(kp, n_input, n_output)
    prep_f32 = prepare_params(params)                # pad/pack weights once

    out = jax.block_until_ready(mlp_forward(x, prep_f32))
    ref = reference_forward(x, params)
    assert out.shape == (batch, n_output)
    assert jnp.allclose(out, ref, atol=1e-4, rtol=1e-4)

    # Multi-tile grid path (>= 2 grid steps, batch not a multiple of the tile).
    key, kx2 = jax.random.split(key)
    xb = jax.random.normal(kx2, (300, n_input), jnp.float32)
    outb = jax.block_until_ready(mlp_forward(xb, prep_f32))
    refb = reference_forward(xb, params)
    assert outb.shape == (300, n_output)
    assert jnp.allclose(outb, refb, atol=1e-4, rtol=1e-4)

    # bf16 matmul operands / f32 accumulation (v6e/v7x MXU fast path).
    prep_bf16 = prepare_params(params, dot_dtype=jnp.bfloat16)
    outh = jax.block_until_ready(mlp_forward(xb, prep_bf16))
    assert outh.shape == (300, n_output)
    assert jnp.allclose(outh, refb, atol=5e-2, rtol=5e-2)

    print("KERNEL_OK")
</pallas_src>

<mosaic_0001>
module attributes {stable_mosaic.version = 11 : i64} {
  func.func @_mlp_kernel(%arg0: i32, %arg1: memref<8x16xf32, #tpu.memory_space<vmem>>, %arg2: memref<16x128xf32, #tpu.memory_space<vmem>>, %arg3: memref<2x128x128xf32, #tpu.memory_space<vmem>>, %arg4: memref<3x128xf32, #tpu.memory_space<vmem>>, %arg5: memref<128x4xf32, #tpu.memory_space<vmem>>, %arg6: memref<1x4xf32, #tpu.memory_space<vmem>>, %arg7: memref<8x4xf32, #tpu.memory_space<vmem>>) attributes {dimension_semantics = [#tpu.dimension_semantics<parallel>], iteration_bounds = array<i64: 1>, scalar_prefetch = 0 : i64, scratch_operands = 0 : i64, tpu.core_type = #tpu.core_type<tc>, window_params = [{transform_indices = @transform_0, window_bounds = array<i64: 8, 16>}, {pipeline_mode = #tpu.pipeline_mode<synchronous>, transform_indices = @transform_1, window_bounds = array<i64: 16, 128>}, {pipeline_mode = #tpu.pipeline_mode<synchronous>, transform_indices = @transform_2, window_bounds = array<i64: 2, 128, 128>}, {pipeline_mode = #tpu.pipeline_mode<synchronous>, transform_indices = @transform_3, window_bounds = array<i64: 3, 128>}, {pipeline_mode = #tpu.pipeline_mode<synchronous>, transform_indices = @transform_4, window_bounds = array<i64: 128, 4>}, {pipeline_mode = #tpu.pipeline_mode<synchronous>, transform_indices = @transform_5, window_bounds = array<i64: 1, 4>}, {transform_indices = @transform_6, window_bounds = array<i64: 8, 4>}]} {
    %c0 = arith.constant 0 : index
    %c0_0 = arith.constant 0 : index
    %0 = vector.load %arg1[%c0, %c0_0] : memref<8x16xf32, #tpu.memory_space<vmem>>, vector<8x16xf32>
    %c0_1 = arith.constant 0 : index
    %c0_2 = arith.constant 0 : index
    %1 = vector.load %arg2[%c0_1, %c0_2] : memref<16x128xf32, #tpu.memory_space<vmem>>, vector<16x128xf32>
    %cst = arith.constant dense<0.000000e+00> : vector<8x128xf32>
    %2 = tpu.matmul %0, %1, %cst {dimension_numbers = #tpu.dot_dimension_numbers<[1], [0], [0], [1], [0, 0, 1, 1], [], []>} : vector<8x16xf32>, vector<16x128xf32>, vector<8x128xf32> -> vector<8x128xf32>
    %c0_3 = arith.constant 0 : index
    %c0_4 = arith.constant 0 : index
    %3 = vector.load %arg4[%c0_3, %c0_4] : memref<3x128xf32, #tpu.memory_space<vmem>>, vector<1x128xf32>
    %4 = vector.broadcast %3 : vector<1x128xf32> to vector<8x128xf32>
    %5 = arith.addf %2, %4 : vector<8x128xf32>
    %cst_5 = arith.constant 0.000000e+00 : f32
    %6 = vector.broadcast %cst_5 : f32 to vector<8x128xf32>
    %7 = arith.maximumf %5, %6 : vector<8x128xf32>
    %c0_6 = arith.constant 0 : index
    %c0_7 = arith.constant 0 : index
    %c0_8 = arith.constant 0 : index
    %8 = vector.load %arg3[%c0_6, %c0_7, %c0_8] : memref<2x128x128xf32, #tpu.memory_space<vmem>>, vector<1x128x128xf32>
    %9 = vector.shape_cast %8 : vector<1x128x128xf32> to vector<128x128xf32>
    %cst_9 = arith.constant dense<0.000000e+00> : vector<8x128xf32>
    %10 = tpu.matmul %7, %9, %cst_9 {dimension_numbers = #tpu.dot_dimension_numbers<[1], [0], [0], [1], [0, 0, 1, 1], [], []>} : vector<8x128xf32>, vector<128x128xf32>, vector<8x128xf32> -> vector<8x128xf32>
    %c1 = arith.constant 1 : index
    %c0_10 = arith.constant 0 : index
    %11 = vector.load %arg4[%c1, %c0_10] : memref<3x128xf32, #tpu.memory_space<vmem>>, vector<1x128xf32>
    %12 = vector.broadcast %11 : vector<1x128xf32> to vector<8x128xf32>
    %13 = arith.addf %10, %12 : vector<8x128xf32>
    %cst_11 = arith.constant 0.000000e+00 : f32
    %14 = vector.broadcast %cst_11 : f32 to vector<8x128xf32>
    %15 = arith.maximumf %13, %14 : vector<8x128xf32>
    %c1_12 = arith.constant 1 : index
    %c0_13 = arith.constant 0 : index
    %c0_14 = arith.constant 0 : index
    %16 = vector.load %arg3[%c1_12, %c0_13, %c0_14] : memref<2x128x128xf32, #tpu.memory_space<vmem>>, vector<1x128x128xf32>
    %17 = vector.shape_cast %16 : vector<1x128x128xf32> to vector<128x128xf32>
    %cst_15 = arith.constant dense<0.000000e+00> : vector<8x128xf32>
    %18 = tpu.matmul %15, %17, %cst_15 {dimension_numbers = #tpu.dot_dimension_numbers<[1], [0], [0], [1], [0, 0, 1, 1], [], []>} : vector<8x128xf32>, vector<128x128xf32>, vector<8x128xf32> -> vector<8x128xf32>
    %c2 = arith.constant 2 : index
    %c0_16 = arith.constant 0 : index
    %19 = vector.load %arg4[%c2, %c0_16] : memref<3x128xf32, #tpu.memory_space<vmem>>, vector<1x128xf32>
    %20 = vector.broadcast %19 : vector<1x128xf32> to vector<8x128xf32>
    %21 = arith.addf %18, %20 : vector<8x128xf32>
    %cst_17 = arith.constant 0.000000e+00 : f32
    %22 = vector.broadcast %cst_17 : f32 to vector<8x128xf32>
    %23 = arith.maximumf %21, %22 : vector<8x128xf32>
    %c0_18 = arith.constant 0 : index
    %c0_19 = arith.constant 0 : index
    %24 = vector.load %arg5[%c0_18, %c0_19] : memref<128x4xf32, #tpu.memory_space<vmem>>, vector<128x4xf32>
    %cst_20 = arith.constant dense<0.000000e+00> : vector<8x4xf32>
    %25 = tpu.matmul %23, %24, %cst_20 {dimension_numbers = #tpu.dot_dimension_numbers<[1], [0], [0], [1], [0, 0, 1, 1], [], []>} : vector<8x128xf32>, vector<128x4xf32>, vector<8x4xf32> -> vector<8x4xf32>
    %c0_21 = arith.constant 0 : index
    %c0_22 = arith.constant 0 : index
    %26 = vector.load %arg6[%c0_21, %c0_22] : memref<1x4xf32, #tpu.memory_space<vmem>>, vector<1x4xf32>
    %27 = vector.broadcast %26 : vector<1x4xf32> to vector<8x4xf32>
    %28 = arith.addf %25, %27 : vector<8x4xf32>
    %c0_23 = arith.constant 0 : index
    %c0_24 = arith.constant 0 : index
    %29 = vector.load %arg7[%c0_23, %c0_24] : memref<8x4xf32, #tpu.memory_space<vmem>>, vector<8x4xf32>
    tpu.vector_store %arg7[%c0_23, %c0_24], %28 {strides = array<i32>} : memref<8x4xf32, #tpu.memory_space<vmem>>, vector<8x4xf32>,
    return
  }
  func.func @transform_0(%arg0: i32) -> (i32, i32) {
    %c0_i32 = arith.constant 0 : i32
    %c0_i32_0 = arith.constant 0 : i32
    return %arg0, %c0_i32 : i32, i32
  }
  func.func @transform_1(%arg0: i32) -> (i32, i32) {
    %c0_i32 = arith.constant 0 : i32
    %c0_i32_0 = arith.constant 0 : i32
    %c0_i32_1 = arith.constant 0 : i32
    return %c0_i32, %c0_i32_0 : i32, i32
  }
  func.func @transform_2(%arg0: i32) -> (i32, i32, i32) {
    %c0_i32 = arith.constant 0 : i32
    %c0_i32_0 = arith.constant 0 : i32
    %c0_i32_1 = arith.constant 0 : i32
    %c0_i32_2 = arith.constant 0 : i32
    return %c0_i32, %c0_i32_0, %c0_i32_1 : i32, i32, i32
  }
  func.func @transform_3(%arg0: i32) -> (i32, i32) {
    %c0_i32 = arith.constant 0 : i32
    %c0_i32_0 = arith.constant 0 : i32
    %c0_i32_1 = arith.constant 0 : i32
    return %c0_i32, %c0_i32_0 : i32, i32
  }
  func.func @transform_4(%arg0: i32) -> (i32, i32) {
    %c0_i32 = arith.constant 0 : i32
    %c0_i32_0 = arith.constant 0 : i32
    %c0_i32_1 = arith.constant 0 : i32
    return %c0_i32, %c0_i32_0 : i32, i32
  }
  func.func @transform_5(%arg0: i32) -> (i32, i32) {
    %c0_i32 = arith.constant 0 : i32
    %c0_i32_0 = arith.constant 0 : i32
    %c0_i32_1 = arith.constant 0 : i32
    return %c0_i32, %c0_i32_0 : i32, i32
  }
  func.func @transform_6(%arg0: i32) -> (i32, i32) {
    %c0_i32 = arith.constant 0 : i32
    %c0_i32_0 = arith.constant 0 : i32
    return %arg0, %c0_i32 : i32, i32
  }
}

</mosaic_0001>

<llo_original>
// kernel: mlp_forward.1
$region0: #{mlp_forward.1}
  #allocation0 [shape = 'u32[]', space=smem, size = 0x4, offset = 0x4, fixed_abs, tag = 'smem constant byte address 0x4 - core index']
  #allocation1 [shape = 'u32[144,128]{1,0:T(1,128)}', space=vmem, size = 0x12000, scoped, tag = 'internal scratch']
  %s0 = inlined_call_operand.vmem [shape: f32[8,16], index: 0, kind: input, shape index: {}]
  %s1 = inlined_call_operand.vmem [shape: f32[16,128], index: 1, kind: input, shape index: {}]
  %s2 = inlined_call_operand.hbm [shape: f32[2,128,128], index: 2, kind: input, shape index: {}]
  %s3 = inlined_call_operand.vmem [shape: f32[3,128], index: 3, kind: input, shape index: {}]
  %s4 = inlined_call_operand.vmem [shape: f32[128,4], index: 4, kind: input, shape index: {}]
  %s5 = inlined_call_operand.vmem [shape: f32[1,4], index: 5, kind: input, shape index: {}]
  %s6 = inlined_call_operand.vmem [shape: f32[8,4], index: 6, kind: output, shape index: {}]
  %s7 = sld [smem:[#allocation0]]
  $region38: #{mlp_forward.1} parent=0
    _
  %s9 = ssub.s32 1, %s7
  %s10 = scalar_select 0, %s9, %s7
  $region1: #{mlp_forward.1} parent=0
    #allocation2 [shape = 'u8[131072]{0}', space=vmem, size = 0x20000, scoped, tag = 'input window, operand 2, single buffered']
    #allocation3 [shape = 's32[1]{0}', space=sflag, size = 0x4, scoped, tag = 'scoped memory for mlp_forward.1']
    %11 = vsyncpa [#allocation3], 0
    // Predicated region
    $region2: #{mlp_forward.1} parent=1 // pred_check
      _
    $region3: #{mlp_forward.1} parent=1 // pred_check_branch
      %13 = sbr.rel (0) target = $region5
    $region4: #{mlp_forward.1} parent=1 // pred_region
      _
    $region5: #{mlp_forward.1} parent=1 // pred_fallthru
      _
    // Predicated region
    $region6: #{mlp_forward.1} parent=1 // pred_check
      _
    $region7: #{mlp_forward.1} parent=1 // pred_check_branch
      %15 = sbr.rel (0) target = $region9
    $region8: #{mlp_forward.1} parent=1 // pred_region
      _
    $region9: #{mlp_forward.1} parent=1 // pred_fallthru
      _
    // Predicated region
    $region10: #{mlp_forward.1} parent=1 // pred_check
      _
    $region11: #{mlp_forward.1} parent=1 // pred_check_branch
      %17 = sbr.rel (0) target = $region13
    $region12: #{mlp_forward.1} parent=1 // pred_region
      %s19 = ssub.s32 4096, 4096
      %20 = vsyncadd [#allocation3], %s19
      %s21 = sshll.u32 [#allocation2], 4
      %s22 = int_to_ptr.vmem [resolvable:$true] %s21
      %27 = dma.hbm_to_vmem [thread:$0]  %s2, 4096, %s22, [#allocation3], 128, 128, 8
    $region13: #{mlp_forward.1} parent=1 // pred_fallthru
      _
    // Predicated region
    $region14: #{mlp_forward.1} parent=1 // pred_check
      _
    $region15: #{mlp_forward.1} parent=1 // pred_check_branch
      %29 = sbr.rel (0) target = $region17
    $region16: #{mlp_forward.1} parent=1 // pred_region
      _
    $region17: #{mlp_forward.1} parent=1 // pred_fallthru
      _
    // Predicated region
    $region18: #{mlp_forward.1} parent=1 // pred_check
      _
    $region19: #{mlp_forward.1} parent=1 // pred_check_branch
      %31 = sbr.rel (0) target = $region21
    $region20: #{mlp_forward.1} parent=1 // pred_region
      _
    $region21: #{mlp_forward.1} parent=1 // pred_fallthru
      _
    // Predicated region
    $region22: #{mlp_forward.1} parent=1 // pred_check
      _
    $region23: #{mlp_forward.1} parent=1 // pred_check_branch
      %33 = sbr.rel (0) target = $region25
    $region24: #{mlp_forward.1} parent=1 // pred_region
      _
    $region25: #{mlp_forward.1} parent=1 // pred_fallthru
      _
    // Predicated region
    $region26: #{mlp_forward.1} parent=1 // pred_check
      _
    $region27: #{mlp_forward.1} parent=1 // pred_check_branch
      %35 = sbr.rel (0) target = $region29
    $region28: #{mlp_forward.1} parent=1 // pred_region
      %36 = dma.done [#allocation3], 4096
    $region29: #{mlp_forward.1} parent=1 // pred_fallthru
      _
    %v37 = vld [vmem:[%s0] sm:$0xff]
    %v38 = vld [vmem:[%s1] sm:$0xff]
    %v39 = vld [vmem:[%s1 + $0x8] sm:$0xff]
    %v40 = vld [vmem:[%s3] sm:$0x1]
    %v41 = vlaneseq
    %v42 = vshrl.u32 %v41, 7
    %v43 = vsub.s32 0, %v42
    %v44 = vrot.slane %v40, %v43
    %vm45 = vcmask 130048
    %v47 = vsel %vm45, %v37, 0
    %49 = vmatprep.subr.mxu0 0.0
    %50 = vmatpush1.msra.mxu0 0.0
    %51 = vmatprep.subr.mxu0 0.0
    %52 = vmatpush1.msra.mxu0 0.0
    %53 = vmatprep.subr.mxu0 0.0
    %54 = vmatpush1.msra.mxu0 0.0
    %55 = vmatprep.subr.mxu0 0.0
    %56 = vmatpush1.msra.mxu0 0.0
    %57 = vmatprep.subr.mxu0 0.0
    %58 = vmatpush1.msra.mxu0 0.0
    %59 = vmatprep.subr.mxu0 0.0
    %60 = vmatpush1.msra.mxu0 0.0
    %61 = vmatprep.subr.mxu0 0.0
    %62 = vmatpush1.msra.mxu0 0.0
    %63 = vmatprep.subr.mxu0 0.0
    %64 = vmatpush1.msra.mxu0 0.0
    %65 = vmatprep.subr.mxu0 0.0
    %66 = vmatpush1.msra.mxu0 0.0
    %67 = vmatprep.subr.mxu0 0.0
    %68 = vmatpush1.msra.mxu0 0.0
    %69 = vmatprep.subr.mxu0 0.0
    %70 = vmatpush1.msra.mxu0 0.0
    %71 = vmatprep.subr.mxu0 0.0
    %72 = vmatpush1.msra.mxu0 0.0
    %73 = vmatprep.subr.mxu0 0.0
    %74 = vmatpush1.msra.mxu0 0.0
    %75 = vmatprep.subr.mxu0 0.0
    %76 = vmatpush1.msra.mxu0 0.0
    %77 = vmatprep.subr.mxu0 0.0
    %78 = vmatpush1.msra.mxu0 %v39
    %79 = vmatprep.subr.mxu0 0.0
    %80 = vmatpush1.msra.mxu0 %v38
    %81 = vmatprep.subr.mxu0 0.0
    %82 = vmatpush2.msra.mxu0 0.0
    %83 = vmatprep.subr.mxu0 0.0
    %84 = vmatpush2.msra.mxu0 0.0
    %85 = vmatprep.subr.mxu0 0.0
    %86 = vmatpush2.msra.mxu0 0.0
    %87 = vmatprep.subr.mxu0 0.0
    %88 = vmatpush2.msra.mxu0 0.0
    %89 = vmatprep.subr.mxu0 0.0
    %90 = vmatpush2.msra.mxu0 0.0
    %91 = vmatprep.subr.mxu0 0.0
    %92 = vmatpush2.msra.mxu0 0.0
    %93 = vmatprep.subr.mxu0 0.0
    %94 = vmatpush2.msra.mxu0 0.0
    %95 = vmatprep.subr.mxu0 0.0
    %96 = vmatpush2.msra.mxu0 0.0
    %97 = vmatprep.subr.mxu0 0.0
    %98 = vmatpush2.msra.mxu0 0.0
    %99 = vmatprep.subr.mxu0 0.0
    %100 = vmatpush2.msra.mxu0 0.0
    %101 = vmatprep.subr.mxu0 0.0
    %102 = vmatpush2.msra.mxu0 0.0
    %103 = vmatprep.subr.mxu0 0.0
    %104 = vmatpush2.msra.mxu0 0.0
    %105 = vmatprep.subr.mxu0 0.0
    %106 = vmatpush2.msra.mxu0 0.0
    %107 = vmatprep.subr.mxu0 0.0
    %108 = vmatpush2.msra.mxu0 0.0
    %109 = vmatprep.subr.mxu0 0.0
    %110 = vmatpush2.msra.mxu0 0.0
    %111 = vmatprep.subr.mxu0 0.0
    %112 = vmatpush2.msra.mxu0 0.0
    %113 = vmatprep.mubr.f32.mxu0 0.0
    %114 = vmatmul.mubr.f32.gmra.mxu0 %v47
    %v115 = vpop.f32.mrf.mxu0
    %v116 = vadd.f32 %v44, %v115
    %v117 = vpop.f32.mrf.mxu0
    %118 = vdwg.mxu0
    %v119 = vmax.f32 %v116, 0.0
    %v120 = vld [vmem:[#allocation2] sm:$0xff]
    %v121 = vld [vmem:[#allocation2 + $0x8] sm:$0xff]
    %v122 = vld [vmem:[#allocation2 + $0x10] sm:$0xff]
    %v123 = vld [vmem:[#allocation2 + $0x18] sm:$0xff]
    %v124 = vld [vmem:[#allocation2 + $0x20] sm:$0xff]
    %v125 = vld [vmem:[#allocation2 + $0x28] sm:$0xff]
    %v126 = vld [vmem:[#allocation2 + $0x30] sm:$0xff]
    %v127 = vld [vmem:[#allocation2 + $0x38] sm:$0xff]
    %v128 = vld [vmem:[#allocation2 + $0x40] sm:$0xff]
    %v129 = vld [vmem:[#allocation2 + $0x48] sm:$0xff]
    %v130 = vld [vmem:[#allocation2 + $0x50] sm:$0xff]
    %v131 = vld [vmem:[#allocation2 + $0x58] sm:$0xff]
    %v132 = vld [vmem:[#allocation2 + $0x60] sm:$0xff]
    %v133 = vld [vmem:[#allocation2 + $0x68] sm:$0xff]
    %v134 = vld [vmem:[#allocation2 + $0x70] sm:$0xff]
    %v135 = vld [vmem:[#allocation2 + $0x78] sm:$0xff]
    %v136 = vld [vmem:[%s3 + $0x1] sm:$0x1]
    %v137 = vlaneseq
    %v138 = vshrl.u32 %v137, 7
    %v139 = vsub.s32 0, %v138
    %v140 = vrot.slane %v136, %v139
    %141 = vmatprep.subr.mxu0 0.0
    %142 = vmatpush1.msra.mxu0 %v135
    %143 = vmatprep.subr.mxu0 0.0
    %144 = vmatpush1.msra.mxu0 %v134
    %145 = vmatprep.subr.mxu0 0.0
    %146 = vmatpush1.msra.mxu0 %v133
    %147 = vmatprep.subr.mxu0 0.0
    %148 = vmatpush1.msra.mxu0 %v132
    %149 = vmatprep.subr.mxu0 0.0
    %150 = vmatpush1.msra.mxu0 %v131
    %151 = vmatprep.subr.mxu0 0.0
    %152 = vmatpush1.msra.mxu0 %v130
    %153 = vmatprep.subr.mxu0 0.0
    %154 = vmatpush1.msra.mxu0 %v129
    %155 = vmatprep.subr.mxu0 0.0
    %156 = vmatpush1.msra.mxu0 %v128
    %157 = vmatprep.subr.mxu0 0.0
    %158 = vmatpush1.msra.mxu0 %v127
    %159 = vmatprep.subr.mxu0 0.0
    %160 = vmatpush1.msra.mxu0 %v126
    %161 = vmatprep.subr.mxu0 0.0
    %162 = vmatpush1.msra.mxu0 %v125
    %163 = vmatprep.subr.mxu0 0.0
    %164 = vmatpush1.msra.mxu0 %v124
    %165 = vmatprep.subr.mxu0 0.0
    %166 = vmatpush1.msra.mxu0 %v123
    %167 = vmatprep.subr.mxu0 0.0
    %168 = vmatpush1.msra.mxu0 %v122
    %169 = vmatprep.subr.mxu0 0.0
    %170 = vmatpush1.msra.mxu0 %v121
    %171 = vmatprep.subr.mxu0 0.0
    %172 = vmatpush1.msra.mxu0 %v120
    %173 = vmatprep.subr.mxu0 0.0
    %174 = vmatpush2.msra.mxu0 0.0
    %175 = vmatprep.subr.mxu0 0.0
    %176 = vmatpush2.msra.mxu0 0.0
    %177 = vmatprep.subr.mxu0 0.0
    %178 = vmatpush2.msra.mxu0 0.0
    %179 = vmatprep.subr.mxu0 0.0
    %180 = vmatpush2.msra.mxu0 0.0
    %181 = vmatprep.subr.mxu0 0.0
    %182 = vmatpush2.msra.mxu0 0.0
    %183 = vmatprep.subr.mxu0 0.0
    %184 = vmatpush2.msra.mxu0 0.0
    %185 = vmatprep.subr.mxu0 0.0
    %186 = vmatpush2.msra.mxu0 0.0
    %187 = vmatprep.subr.mxu0 0.0
    %188 = vmatpush2.msra.mxu0 0.0
    %189 = vmatprep.subr.mxu0 0.0
    %190 = vmatpush2.msra.mxu0 0.0
    %191 = vmatprep.subr.mxu0 0.0
    %192 = vmatpush2.msra.mxu0 0.0
    %193 = vmatprep.subr.mxu0 0.0
    %194 = vmatpush2.msra.mxu0 0.0
    %195 = vmatprep.subr.mxu0 0.0
    %196 = vmatpush2.msra.mxu0 0.0
    %197 = vmatprep.subr.mxu0 0.0
    %198 = vmatpush2.msra.mxu0 0.0
    %199 = vmatprep.subr.mxu0 0.0
    %200 = vmatpush2.msra.mxu0 0.0
    %201 = vmatprep.subr.mxu0 0.0
    %202 = vmatpush2.msra.mxu0 0.0
    %203 = vmatprep.subr.mxu0 0.0
    %204 = vmatpush2.msra.mxu0 0.0
    %205 = vmatprep.mubr.f32.mxu0 0.0
    %206 = vmatmul.mubr.f32.gmra.mxu0 %v119
    %v207 = vpop.f32.mrf.mxu0
    %v208 = vadd.f32 %v140, %v207
    %v209 = vpop.f32.mrf.mxu0
    %210 = vdwg.mxu0
    %v211 = vmax.f32 %v208, 0.0
    %s212 = scalar_lea.vmem [#allocation2], 128
    %v213 = vld [vmem:[%s212] sm:$0xff]
    %v214 = vld [vmem:[%s212 + $0x8] sm:$0xff]
    %v215 = vld [vmem:[%s212 + $0x10] sm:$0xff]
    %v216 = vld [vmem:[%s212 + $0x18] sm:$0xff]
    %v217 = vld [vmem:[%s212 + $0x20] sm:$0xff]
    %v218 = vld [vmem:[%s212 + $0x28] sm:$0xff]
    %v219 = vld [vmem:[%s212 + $0x30] sm:$0xff]
    %v220 = vld [vmem:[%s212 + $0x38] sm:$0xff]
    %v221 = vld [vmem:[%s212 + $0x40] sm:$0xff]
    %v222 = vld [vmem:[%s212 + $0x48] sm:$0xff]
    %v223 = vld [vmem:[%s212 + $0x50] sm:$0xff]
    %v224 = vld [vmem:[%s212 + $0x58] sm:$0xff]
    %v225 = vld [vmem:[%s212 + $0x60] sm:$0xff]
    %v226 = vld [vmem:[%s212 + $0x68] sm:$0xff]
    %v227 = vld [vmem:[%s212 + $0x70] sm:$0xff]
    %v228 = vld [vmem:[%s212 + $0x78] sm:$0xff]
    %v229 = vld [vmem:[%s3 + $0x2] sm:$0x1]
    %v230 = vlaneseq
    %v231 = vshrl.u32 %v230, 7
    %v232 = vsub.s32 0, %v231
    %v233 = vrot.slane %v229, %v232
    %234 = vmatprep.subr.mxu0 0.0
    %235 = vmatpush1.msra.mxu0 %v228
    %236 = vmatprep.subr.mxu0 0.0
    %237 = vmatpush1.msra.mxu0 %v227
    %238 = vmatprep.subr.mxu0 0.0
    %239 = vmatpush1.msra.mxu0 %v226
    %240 = vmatprep.subr.mxu0 0.0
    %241 = vmatpush1.msra.mxu0 %v225
    %242 = vmatprep.subr.mxu0 0.0
    %243 = vmatpush1.msra.mxu0 %v224
    %244 = vmatprep.subr.mxu0 0.0
    %245 = vmatpush1.msra.mxu0 %v223
    %246 = vmatprep.subr.mxu0 0.0
    %247 = vmatpush1.msra.mxu0 %v222
    %248 = vmatprep.subr.mxu0 0.0
    %249 = vmatpush1.msra.mxu0 %v221
    %250 = vmatprep.subr.mxu0 0.0
    %251 = vmatpush1.msra.mxu0 %v220
    %252 = vmatprep.subr.mxu0 0.0
    %253 = vmatpush1.msra.mxu0 %v219
    %254 = vmatprep.subr.mxu0 0.0
    %255 = vmatpush1.msra.mxu0 %v218
    %256 = vmatprep.subr.mxu0 0.0
    %257 = vmatpush1.msra.mxu0 %v217
    %258 = vmatprep.subr.mxu0 0.0
    %259 = vmatpush1.msra.mxu0 %v216
    %260 = vmatprep.subr.mxu0 0.0
    %261 = vmatpush1.msra.mxu0 %v215
    %262 = vmatprep.subr.mxu0 0.0
    %263 = vmatpush1.msra.mxu0 %v214
    %264 = vmatprep.subr.mxu0 0.0
    %265 = vmatpush1.msra.mxu0 %v213
    %266 = vmatprep.subr.mxu0 0.0
    %267 = vmatpush2.msra.mxu0 0.0
    %268 = vmatprep.subr.mxu0 0.0
    %269 = vmatpush2.msra.mxu0 0.0
    %270 = vmatprep.subr.mxu0 0.0
    %271 = vmatpush2.msra.mxu0 0.0
    %272 = vmatprep.subr.mxu0 0.0
    %273 = vmatpush2.msra.mxu0 0.0
    %274 = vmatprep.subr.mxu0 0.0
    %275 = vmatpush2.msra.mxu0 0.0
    %276 = vmatprep.subr.mxu0 0.0
    %277 = vmatpush2.msra.mxu0 0.0
    %278 = vmatprep.subr.mxu0 0.0
    %279 = vmatpush2.msra.mxu0 0.0
    %280 = vmatprep.subr.mxu0 0.0
    %281 = vmatpush2.msra.mxu0 0.0
    %282 = vmatprep.subr.mxu0 0.0
    %283 = vmatpush2.msra.mxu0 0.0
    %284 = vmatprep.subr.mxu0 0.0
    %285 = vmatpush2.msra.mxu0 0.0
    %286 = vmatprep.subr.mxu0 0.0
    %287 = vmatpush2.msra.mxu0 0.0
    %288 = vmatprep.subr.mxu0 0.0
    %289 = vmatpush2.msra.mxu0 0.0
    %290 = vmatprep.subr.mxu0 0.0
    %291 = vmatpush2.msra.mxu0 0.0
    %292 = vmatprep.subr.mxu0 0.0
    %293 = vmatpush2.msra.mxu0 0.0
    %294 = vmatprep.subr.mxu0 0.0
    %295 = vmatpush2.msra.mxu0 0.0
    %296 = vmatprep.subr.mxu0 0.0
    %297 = vmatpush2.msra.mxu0 0.0
    %298 = vmatprep.mubr.f32.mxu0 0.0
    %299 = vmatmul.mubr.f32.gmra.mxu0 %v211
    %v300 = vpop.f32.mrf.mxu0
    %v301 = vadd.f32 %v233, %v300
    %v302 = vpop.f32.mrf.mxu0
    %303 = vdwg.mxu0
    %v304 = vmax.f32 %v301, 0.0
    %v305 = vld [vmem:[%s4] sm:$0xff]
    %v306 = vld [vmem:[%s4 + $0x8] sm:$0xff]
    %v307 = vld [vmem:[%s4 + $0x10] sm:$0xff]
    %v308 = vld [vmem:[%s4 + $0x18] sm:$0xff]
    %v309 = vld [vmem:[%s4 + $0x20] sm:$0xff]
    %v310 = vld [vmem:[%s4 + $0x28] sm:$0xff]
    %v311 = vld [vmem:[%s4 + $0x30] sm:$0xff]
    %v312 = vld [vmem:[%s4 + $0x38] sm:$0xff]
    %v313 = vld [vmem:[%s4 + $0x40] sm:$0xff]
    %v314 = vld [vmem:[%s4 + $0x48] sm:$0xff]
    %v315 = vld [vmem:[%s4 + $0x50] sm:$0xff]
    %v316 = vld [vmem:[%s4 + $0x58] sm:$0xff]
    %v317 = vld [vmem:[%s4 + $0x60] sm:$0xff]
    %v318 = vld [vmem:[%s4 + $0x68] sm:$0xff]
    %v319 = vld [vmem:[%s4 + $0x70] sm:$0xff]
    %v320 = vld [vmem:[%s4 + $0x78] sm:$0xff]
    %v321 = vld [vmem:[%s5] sm:$0x1]
    %v323 = vlaneseq
    %v324 = vshrl.u32 %v323, 7
    %v325 = vsub.s32 0, %v324
    %v326 = vrot.slane %v321, %v325
    %328 = vmatprep.subr.mxu0 0.0
    %329 = vmatpush1.msra.mxu0 %v320
    %330 = vmatprep.subr.mxu0 0.0
    %331 = vmatpush1.msra.mxu0 %v319
    %332 = vmatprep.subr.mxu0 0.0
    %333 = vmatpush1.msra.mxu0 %v318
    %334 = vmatprep.subr.mxu0 0.0
    %335 = vmatpush1.msra.mxu0 %v317
    %336 = vmatprep.subr.mxu0 0.0
    %337 = vmatpush1.msra.mxu0 %v316
    %338 = vmatprep.subr.mxu0 0.0
    %339 = vmatpush1.msra.mxu0 %v315
    %340 = vmatprep.subr.mxu0 0.0
    %341 = vmatpush1.msra.mxu0 %v314
    %342 = vmatprep.subr.mxu0 0.0
    %343 = vmatpush1.msra.mxu0 %v313
    %344 = vmatprep.subr.mxu0 0.0
    %345 = vmatpush1.msra.mxu0 %v312
    %346 = vmatprep.subr.mxu0 0.0
    %347 = vmatpush1.msra.mxu0 %v311
    %348 = vmatprep.subr.mxu0 0.0
    %349 = vmatpush1.msra.mxu0 %v310
    %350 = vmatprep.subr.mxu0 0.0
    %351 = vmatpush1.msra.mxu0 %v309
    %352 = vmatprep.subr.mxu0 0.0
    %353 = vmatpush1.msra.mxu0 %v308
    %354 = vmatprep.subr.mxu0 0.0
    %355 = vmatpush1.msra.mxu0 %v307
    %356 = vmatprep.subr.mxu0 0.0
    %357 = vmatpush1.msra.mxu0 %v306
    %358 = vmatprep.subr.mxu0 0.0
    %359 = vmatpush1.msra.mxu0 %v305
    %360 = vmatprep.subr.mxu0 0.0
    %361 = vmatpush2.msra.mxu0 0.0
    %362 = vmatprep.subr.mxu0 0.0
    %363 = vmatpush2.msra.mxu0 0.0
    %364 = vmatprep.subr.mxu0 0.0
    %365 = vmatpush2.msra.mxu0 0.0
    %366 = vmatprep.subr.mxu0 0.0
    %367 = vmatpush2.msra.mxu0 0.0
    %368 = vmatprep.subr.mxu0 0.0
    %369 = vmatpush2.msra.mxu0 0.0
    %370 = vmatprep.subr.mxu0 0.0
    %371 = vmatpush2.msra.mxu0 0.0
    %372 = vmatprep.subr.mxu0 0.0
    %373 = vmatpush2.msra.mxu0 0.0
    %374 = vmatprep.subr.mxu0 0.0
    %375 = vmatpush2.msra.mxu0 0.0
    %376 = vmatprep.subr.mxu0 0.0
    %377 = vmatpush2.msra.mxu0 0.0
    %378 = vmatprep.subr.mxu0 0.0
    %379 = vmatpush2.msra.mxu0 0.0
    %380 = vmatprep.subr.mxu0 0.0
    %381 = vmatpush2.msra.mxu0 0.0
    %382 = vmatprep.subr.mxu0 0.0
    %383 = vmatpush2.msra.mxu0 0.0
    %384 = vmatprep.subr.mxu0 0.0
    %385 = vmatpush2.msra.mxu0 0.0
    %386 = vmatprep.subr.mxu0 0.0
    %387 = vmatpush2.msra.mxu0 0.0
    %388 = vmatprep.subr.mxu0 0.0
    %389 = vmatpush2.msra.mxu0 0.0
    %390 = vmatprep.subr.mxu0 0.0
    %391 = vmatpush2.msra.mxu0 0.0
    %392 = vmatprep.mubr.f32.mxu0 0.0
    %393 = vmatmul.mubr.f32.gmra.mxu0 %v304
    %v394 = vpop.f32.mrf.mxu0
    %v395 = vadd.f32 %v326, %v394
    %v396 = vpop.f32.mrf.mxu0
    %397 = vdwg.mxu0
    %vm398 = vcmask 31744
    %399 = vst.msk [vmem:[%s6] sm:$0xff] %vm398, %v395
    // Predicated region
    $region30: #{mlp_forward.1} parent=1 // pred_check
      _
    $region31: #{mlp_forward.1} parent=1 // pred_check_branch
      %401 = sbr.rel (0) target = $region33
    $region32: #{mlp_forward.1} parent=1 // pred_region
      _
    $region33: #{mlp_forward.1} parent=1 // pred_fallthru
      _
    // Predicated region
    $region34: #{mlp_forward.1} parent=1 // pred_check
      _
    $region35: #{mlp_forward.1} parent=1 // pred_check_branch
      %403 = sbr.rel (0) target = $region37
    $region36: #{mlp_forward.1} parent=1 // pred_region
      _
    $region37: #{mlp_forward.1} parent=1 // pred_fallthru
      _
    %404 = vsyncpa [#allocation3], 1

</llo_original>
